<compile_context>
chip_gen: v7x
topology: tpu7x:2x2x1
jax: 0.10.0
libtpu: 0.0.40
codegen_flags: <defaults>
</compile_context>

<pallas_src>
import math

import jax
import jax.numpy as jnp
from jax import lax
from jax.experimental import pallas as pl
from jax.experimental.pallas import tpu as pltpu

# ---------------------------------------------------------------------------
# Model hyper-parameters (small, consistent with the module's __init__)
# ---------------------------------------------------------------------------
ENSEMBLE_SIZE = 3
IN_FEATURES = 16
HIDDEN_FEATURES = 32
OUT_FEATURES = 8
BATCH = 8
LOG_STD_MIN = -20.0
LOG_STD_MAX = 1.0

E = ENSEMBLE_SIZE

# Real (block-concatenated over the ensemble) output width of each layer.
N_REAL = (
    E * HIDDEN_FEATURES,       # 96   lin1
    E * HIDDEN_FEATURES * 2,   # 192  lin2
    E * HIDDEN_FEATURES * 3,   # 288  lin3
    E * HIDDEN_FEATURES,       # 96   lin4
    E * 2 * OUT_FEATURES,      # 48   lin5 (mu & log_std)
)


def _round_up(v, m):
    return ((v + m - 1) // m) * m


K1_PAD = _round_up(E * IN_FEATURES + 1, 128)          # 128  (input incl. bias col)
N_PAD = tuple(_round_up(n, 128) for n in N_REAL)      # (128, 256, 384, 128, 128)
OUT_PAD = N_PAD[-1]                                   # 128

# Row index of the folded bias inside each packed weight
# (== real width of the previous layer's activation block).
BIAS_ROW = (E * IN_FEATURES,) + N_REAL[:-1]           # (48, 96, 192, 288, 96)

LS_OFF = E * OUT_FEATURES                             # 24: start of log_std block
DIS_COL = 2 * E * OUT_FEATURES                        # 48: column carrying `dis`


# ---------------------------------------------------------------------------
# Fused Pallas kernel: 5 block-diag matmuls + ReLU + clamp + JRD epilogue
# ---------------------------------------------------------------------------
def _fused_kernel(x_ref, w1_ref, w2_ref, w3_ref, w4_ref, w5_ref, out_ref):
    def layer(h, w_ref, bias_col):
        # h: (B, K_pad), w: (K_pad, N_pad); bias is folded in as a weight row,
        # so after ReLU we re-arm the "1" indicator column for the next layer.
        y = jnp.dot(h, w_ref[...], preferred_element_type=jnp.float32)
        y = jnp.maximum(y, 0.0)
        col = lax.broadcasted_iota(jnp.int32, y.shape, 1)
        return jnp.where(col == bias_col, 1.0, y)

    h = layer(x_ref[...], w1_ref, N_REAL[0])
    h = layer(h, w2_ref, N_REAL[1])
    h = layer(h, w3_ref, N_REAL[2])
    h = layer(h, w4_ref, N_REAL[3])
    out5 = jnp.dot(h, w5_ref[...], preferred_element_type=jnp.float32)   # (B, 128)

    # clamp only the log_std columns [LS_OFF, DIS_COL)
    col = lax.broadcasted_iota(jnp.int32, out5.shape, 1)
    is_ls = jnp.logical_and(col >= LS_OFF, col < DIS_COL)
    res = jnp.where(is_ls, jnp.clip(out5, LOG_STD_MIN, LOG_STD_MAX), out5)

    # ---- Jensen-Renyi divergence epilogue (uniform mixture of E Gaussians) ----
    d = OUT_FEATURES
    log2 = math.log(2.0)
    mus = [res[:, e * d:(e + 1) * d] for e in range(E)]                   # (B, d)
    lss = [res[:, LS_OFF + e * d: LS_OFF + (e + 1) * d] for e in range(E)]
    variances = [jnp.exp(2.0 * ls) for ls in lss]                         # var = exp(2*log_std)
    sum_log_var = [jnp.sum(2.0 * ls, axis=-1, keepdims=True) for ls in lss]

    # pairwise log z terms; exploit symmetry (6 terms instead of 9)
    terms = []
    for i in range(E):                                   # diagonal, closed form
        terms.append((-0.5 * (d * log2 + sum_log_var[i]), 1.0))
    for i in range(E):                                   # off-diagonal, counted twice
        for j in range(i + 1, E):
            diff = mus[i] - mus[j]
            vs = variances[i] + variances[j]
            err = jnp.sum(diff * diff / vs, axis=-1, keepdims=True)
            det = jnp.sum(jnp.log(vs), axis=-1, keepdims=True)
            terms.append((-0.5 * (err + det), 2.0))

    mx = terms[0][0]
    for v, _ in terms[1:]:
        mx = jnp.maximum(mx, v)
    s = jnp.zeros_like(mx)
    for v, w in terms:
        s = s + w * jnp.exp(v - mx)
    entropy_of_mixture = -mx - jnp.log(s / float(E * E))                  # (B, 1)

    mean_entropy = sum(sum_log_var) / float(E) * 0.5 + d * log2 * 0.5     # (B, 1)
    dis = jnp.abs(entropy_of_mixture - mean_entropy)                      # (B, 1)

    # pack dis into lane DIS_COL and do one lane-dense 128-wide store
    out_ref[...] = jnp.where(col == DIS_COL, dis, res)


# ---------------------------------------------------------------------------
# Wrapper reproducing EnsembleStochasticLinear.forward (explore_var='jrd')
# ---------------------------------------------------------------------------
def ensemble_stochastic_linear_forward(x, packed_ws):
    """x: (E, B, in_features) or (B, in_features) shared across the ensemble.
    packed_ws: 5 padded block-diagonal weights from pack_params()."""
    if x.ndim == 2:
        x = jnp.broadcast_to(x[None], (E,) + x.shape)
    _, B, din = x.shape

    # block-structured, padded input (B, K1_PAD): cols [e*in:(e+1)*in] = x_e,
    # col E*in = 1.0 (bias indicator for layer 1), rest zero.
    x_blk = jnp.transpose(x, (1, 0, 2)).reshape(B, E * din)
    x_pad = jnp.zeros((B, K1_PAD), jnp.float32)
    x_pad = x_pad.at[:, :E * din].set(x_blk)
    x_pad = x_pad.at[:, E * din].set(1.0)

    flops = 2 * B * (K1_PAD * N_PAD[0] + N_PAD[0] * N_PAD[1] + N_PAD[1] * N_PAD[2]
                     + N_PAD[2] * N_PAD[3] + N_PAD[3] * N_PAD[4])
    param_elems = (K1_PAD * N_PAD[0] + N_PAD[0] * N_PAD[1] + N_PAD[1] * N_PAD[2]
                   + N_PAD[2] * N_PAD[3] + N_PAD[3] * N_PAD[4])
    bytes_accessed = 4 * (param_elems + B * K1_PAD + B * OUT_PAD)
    transcendentals = B * (E * OUT_FEATURES + 3 * OUT_FEATURES + E * (E + 1) // 2 + 2)

    vmem_spec = pl.BlockSpec(memory_space=pltpu.MemorySpace.VMEM)
    out = pl.pallas_call(
        _fused_kernel,
        out_shape=jax.ShapeDtypeStruct((B, OUT_PAD), jnp.float32),
        in_specs=[vmem_spec] * 6,
        out_specs=vmem_spec,
        cost_estimate=pl.CostEstimate(flops=flops,
                                      transcendentals=transcendentals,
                                      bytes_accessed=bytes_accessed),
    )(x_pad, *packed_ws)

    d = OUT_FEATURES
    mu = out[:, :E * d].reshape(B, E, d).transpose(1, 0, 2)               # (E, B, d)
    log_std = out[:, LS_OFF:DIS_COL].reshape(B, E, d).transpose(1, 0, 2)  # (E, B, d)
    dis = out[:, DIS_COL:DIS_COL + 1]                                     # (B, 1)

    ensemble_outputs = [(mu[i], log_std[i]) for i in range(E)]
    return (*ensemble_outputs, dis)


# ---------------------------------------------------------------------------
# Parameter init (natural EnsembleLinear shapes) + host-side packing
# ---------------------------------------------------------------------------
def init_params(key):
    layer_dims = [
        (IN_FEATURES, HIDDEN_FEATURES),
        (HIDDEN_FEATURES, HIDDEN_FEATURES * 2),
        (HIDDEN_FEATURES * 2, HIDDEN_FEATURES * 3),
        (HIDDEN_FEATURES * 3, HIDDEN_FEATURES),
        (HIDDEN_FEATURES, OUT_FEATURES * 2),
    ]
    params = []
    for (din, dout) in layer_dims:
        key, kw, kb = jax.random.split(key, 3)
        bound = 1.0 / math.sqrt(din)
        w = jax.random.uniform(kw, (E, din, dout), minval=-bound, maxval=bound,
                               dtype=jnp.float32)
        b = jax.random.uniform(kb, (E, 1, dout), minval=-bound, maxval=bound,
                               dtype=jnp.float32)
        params.append((w, b))
    return params


def pack_params(params):
    """Build 5 padded block-diagonal weights with the bias folded in as a row.
    Layer 5 columns are reordered to [mu0|mu1|mu2 | ls0|ls1|ls2]."""
    kdims = (K1_PAD,) + N_PAD[:-1]
    packed = []
    for li, ((w, b), kp, np_, brow) in enumerate(zip(params, kdims, N_PAD, BIAS_ROW)):
        _, din, dout = w.shape
        wp = jnp.zeros((kp, np_), jnp.float32)
        for e in range(E):
            if li < 4:
                wp = wp.at[e * din:(e + 1) * din, e * dout:(e + 1) * dout].set(w[e])
                wp = wp.at[brow, e * dout:(e + 1) * dout].set(b[e, 0])
            else:
                d = OUT_FEATURES
                wp = wp.at[e * din:(e + 1) * din, e * d:(e + 1) * d].set(w[e][:, :d])
                wp = wp.at[e * din:(e + 1) * din,
                           E * d + e * d: E * d + (e + 1) * d].set(w[e][:, d:])
                wp = wp.at[brow, e * d:(e + 1) * d].set(b[e, 0, :d])
                wp = wp.at[brow, E * d + e * d: E * d + (e + 1) * d].set(b[e, 0, d:])
        packed.append(wp)
    return packed


# ---------------------------------------------------------------------------
# Pure-JAX reference for verification (natural / unpacked params)
# ---------------------------------------------------------------------------
def reference_forward(x, params):
    h = x
    for li, (w, b) in enumerate(params):
        h = jnp.einsum('ebi,eio->ebo', h, w) + b
        if li < len(params) - 1:
            h = jnp.maximum(h, 0.0)
    mu = h[:, :, :OUT_FEATURES]
    log_std = jnp.clip(h[:, :, OUT_FEATURES:], LOG_STD_MIN, LOG_STD_MAX)
    var = jnp.exp(log_std) ** 2
    mu_diff = mu[:, None] - mu[None, :]                   # (E,E,B,d)
    var_sum = var[:, None] + var[None, :]
    err = jnp.sum(mu_diff * mu_diff / var_sum, axis=-1)   # (E,E,B)
    det = jnp.sum(jnp.log(var_sum), axis=-1)
    log_z = (-0.5 * (err + det)).reshape(-1, mu.shape[1])
    mx = log_z.max(axis=0, keepdims=True)
    ent_mean = (-mx - jnp.log(jnp.exp(log_z - mx).mean(axis=0, keepdims=True)))[0]
    mean_ent = jnp.sum(jnp.log(var), axis=-1).mean(axis=0) / 2.0 \
        + OUT_FEATURES * math.log(2.0) / 2.0
    dis = jnp.abs(ent_mean - mean_ent)[:, None]
    return mu, log_std, dis


if __name__ == "__main__":
    key = jax.random.PRNGKey(0)
    key, kx = jax.random.split(key)
    # same state shared by every ensemble member: pass the single (B, in) tensor
    x_single = jax.random.normal(kx, (BATCH, IN_FEATURES), dtype=jnp.float32)

    params = init_params(key)
    packed = pack_params(params)

    fwd = jax.jit(ensemble_stochastic_linear_forward)
    outs = fwd(x_single, packed)
    outs = jax.block_until_ready(outs)

    # verify against pure-JAX reference (explicit per-member input layout)
    x_full = jnp.broadcast_to(x_single[None], (E, BATCH, IN_FEATURES))
    mu_ref, ls_ref, dis_ref = reference_forward(x_full, params)
    for i in range(E):
        mu_i, ls_i = outs[i]
        assert jnp.allclose(mu_i, mu_ref[i], rtol=1e-3, atol=1e-3)
        assert jnp.allclose(ls_i, ls_ref[i], rtol=1e-3, atol=1e-3)
    assert jnp.allclose(outs[-1], dis_ref, rtol=1e-3, atol=1e-3)

    print("KERNEL_OK")
</pallas_src>

<mosaic_0001>
module attributes {stable_mosaic.version = 11 : i64} {
  func.func @_fused_kernel(%arg0: memref<8x128xf32, #tpu.memory_space<vmem>>, %arg1: memref<128x128xf32, #tpu.memory_space<vmem>>, %arg2: memref<128x256xf32, #tpu.memory_space<vmem>>, %arg3: memref<256x384xf32, #tpu.memory_space<vmem>>, %arg4: memref<384x128xf32, #tpu.memory_space<vmem>>, %arg5: memref<128x128xf32, #tpu.memory_space<vmem>>, %arg6: memref<8x128xf32, #tpu.memory_space<vmem>>) attributes {dimension_semantics = [], scalar_prefetch = 0 : i64, scratch_operands = 0 : i64, tpu.core_type = #tpu.core_type<tc>} {
    %c0 = arith.constant 0 : index
    %c0_0 = arith.constant 0 : index
    %0 = vector.load %arg0[%c0, %c0_0] : memref<8x128xf32, #tpu.memory_space<vmem>>, vector<8x128xf32>
    %c0_1 = arith.constant 0 : index
    %c0_2 = arith.constant 0 : index
    %1 = vector.load %arg1[%c0_1, %c0_2] : memref<128x128xf32, #tpu.memory_space<vmem>>, vector<128x128xf32>
    %cst = arith.constant dense<0.000000e+00> : vector<8x128xf32>
    %2 = tpu.matmul %0, %1, %cst {dimension_numbers = #tpu.dot_dimension_numbers<[1], [0], [0], [1], [0, 0, 1, 1], [], []>} : vector<8x128xf32>, vector<128x128xf32>, vector<8x128xf32> -> vector<8x128xf32>
    %cst_3 = arith.constant 0.000000e+00 : f32
    %3 = vector.broadcast %cst_3 : f32 to vector<8x128xf32>
    %4 = arith.maximumf %2, %3 : vector<8x128xf32>
    %5 = tpu.iota {dimensions = array<i32: 1>} : vector<8x128xi32>
    %c96_i32 = arith.constant 96 : i32
    %6 = vector.broadcast %c96_i32 : i32 to vector<8x128xi32>
    %7 = arith.cmpi eq, %5, %6 : vector<8x128xi32>
    %cst_4 = arith.constant 1.000000e+00 : f32
    %8 = vector.broadcast %cst_4 : f32 to vector<8x128xf32>
    %9 = arith.select %7, %8, %4 : vector<8x128xi1>, vector<8x128xf32>
    %c0_5 = arith.constant 0 : index
    %c0_6 = arith.constant 0 : index
    %10 = vector.load %arg2[%c0_5, %c0_6] : memref<128x256xf32, #tpu.memory_space<vmem>>, vector<128x256xf32>
    %cst_7 = arith.constant dense<0.000000e+00> : vector<8x256xf32>
    %11 = tpu.matmul %9, %10, %cst_7 {dimension_numbers = #tpu.dot_dimension_numbers<[1], [0], [0], [1], [0, 0, 1, 1], [], []>} : vector<8x128xf32>, vector<128x256xf32>, vector<8x256xf32> -> vector<8x256xf32>
    %cst_8 = arith.constant 0.000000e+00 : f32
    %12 = vector.broadcast %cst_8 : f32 to vector<8x256xf32>
    %13 = arith.maximumf %11, %12 : vector<8x256xf32>
    %14 = tpu.iota {dimensions = array<i32: 1>} : vector<8x256xi32>
    %c192_i32 = arith.constant 192 : i32
    %15 = vector.broadcast %c192_i32 : i32 to vector<8x256xi32>
    %16 = arith.cmpi eq, %14, %15 : vector<8x256xi32>
    %cst_9 = arith.constant 1.000000e+00 : f32
    %17 = vector.broadcast %cst_9 : f32 to vector<8x256xf32>
    %18 = arith.select %16, %17, %13 : vector<8x256xi1>, vector<8x256xf32>
    %c0_10 = arith.constant 0 : index
    %c0_11 = arith.constant 0 : index
    %19 = vector.load %arg3[%c0_10, %c0_11] : memref<256x384xf32, #tpu.memory_space<vmem>>, vector<256x384xf32>
    %cst_12 = arith.constant dense<0.000000e+00> : vector<8x384xf32>
    %20 = tpu.matmul %18, %19, %cst_12 {dimension_numbers = #tpu.dot_dimension_numbers<[1], [0], [0], [1], [0, 0, 1, 1], [], []>} : vector<8x256xf32>, vector<256x384xf32>, vector<8x384xf32> -> vector<8x384xf32>
    %cst_13 = arith.constant 0.000000e+00 : f32
    %21 = vector.broadcast %cst_13 : f32 to vector<8x384xf32>
    %22 = arith.maximumf %20, %21 : vector<8x384xf32>
    %23 = tpu.iota {dimensions = array<i32: 1>} : vector<8x384xi32>
    %c288_i32 = arith.constant 288 : i32
    %24 = vector.broadcast %c288_i32 : i32 to vector<8x384xi32>
    %25 = arith.cmpi eq, %23, %24 : vector<8x384xi32>
    %cst_14 = arith.constant 1.000000e+00 : f32
    %26 = vector.broadcast %cst_14 : f32 to vector<8x384xf32>
    %27 = arith.select %25, %26, %22 : vector<8x384xi1>, vector<8x384xf32>
    %c0_15 = arith.constant 0 : index
    %c0_16 = arith.constant 0 : index
    %28 = vector.load %arg4[%c0_15, %c0_16] : memref<384x128xf32, #tpu.memory_space<vmem>>, vector<384x128xf32>
    %cst_17 = arith.constant dense<0.000000e+00> : vector<8x128xf32>
    %29 = tpu.matmul %27, %28, %cst_17 {dimension_numbers = #tpu.dot_dimension_numbers<[1], [0], [0], [1], [0, 0, 1, 1], [], []>} : vector<8x384xf32>, vector<384x128xf32>, vector<8x128xf32> -> vector<8x128xf32>
    %cst_18 = arith.constant 0.000000e+00 : f32
    %30 = vector.broadcast %cst_18 : f32 to vector<8x128xf32>
    %31 = arith.maximumf %29, %30 : vector<8x128xf32>
    %32 = tpu.iota {dimensions = array<i32: 1>} : vector<8x128xi32>
    %c96_i32_19 = arith.constant 96 : i32
    %33 = vector.broadcast %c96_i32_19 : i32 to vector<8x128xi32>
    %34 = arith.cmpi eq, %32, %33 : vector<8x128xi32>
    %cst_20 = arith.constant 1.000000e+00 : f32
    %35 = vector.broadcast %cst_20 : f32 to vector<8x128xf32>
    %36 = arith.select %34, %35, %31 : vector<8x128xi1>, vector<8x128xf32>
    %c0_21 = arith.constant 0 : index
    %c0_22 = arith.constant 0 : index
    %37 = vector.load %arg5[%c0_21, %c0_22] : memref<128x128xf32, #tpu.memory_space<vmem>>, vector<128x128xf32>
    %cst_23 = arith.constant dense<0.000000e+00> : vector<8x128xf32>
    %38 = tpu.matmul %36, %37, %cst_23 {dimension_numbers = #tpu.dot_dimension_numbers<[1], [0], [0], [1], [0, 0, 1, 1], [], []>} : vector<8x128xf32>, vector<128x128xf32>, vector<8x128xf32> -> vector<8x128xf32>
    %39 = tpu.iota {dimensions = array<i32: 1>} : vector<8x128xi32>
    %c24_i32 = arith.constant 24 : i32
    %40 = vector.broadcast %c24_i32 : i32 to vector<8x128xi32>
    %41 = arith.cmpi sge, %39, %40 : vector<8x128xi32>
    %c48_i32 = arith.constant 48 : i32
    %42 = vector.broadcast %c48_i32 : i32 to vector<8x128xi32>
    %43 = arith.cmpi slt, %39, %42 : vector<8x128xi32>
    %44 = arith.andi %41, %43 : vector<8x128xi1>
    %cst_24 = arith.constant -2.000000e+01 : f32
    %cst_25 = arith.constant 1.000000e+00 : f32
    %45 = vector.broadcast %cst_24 : f32 to vector<8x128xf32>
    %46 = arith.maximumf %45, %38 : vector<8x128xf32>
    %47 = vector.broadcast %cst_25 : f32 to vector<8x128xf32>
    %48 = arith.minimumf %47, %46 : vector<8x128xf32>
    %49 = arith.select %44, %48, %38 : vector<8x128xi1>, vector<8x128xf32>
    %50 = vector.extract_strided_slice %49 {offsets = [0, 0], sizes = [8, 8], strides = [1, 1]} : vector<8x128xf32> to vector<8x8xf32>
    %51 = vector.extract_strided_slice %49 {offsets = [0, 8], sizes = [8, 8], strides = [1, 1]} : vector<8x128xf32> to vector<8x8xf32>
    %52 = vector.extract_strided_slice %49 {offsets = [0, 16], sizes = [8, 8], strides = [1, 1]} : vector<8x128xf32> to vector<8x8xf32>
    %53 = vector.extract_strided_slice %49 {offsets = [0, 24], sizes = [8, 8], strides = [1, 1]} : vector<8x128xf32> to vector<8x8xf32>
    %54 = vector.extract_strided_slice %49 {offsets = [0, 32], sizes = [8, 8], strides = [1, 1]} : vector<8x128xf32> to vector<8x8xf32>
    %55 = vector.extract_strided_slice %49 {offsets = [0, 40], sizes = [8, 8], strides = [1, 1]} : vector<8x128xf32> to vector<8x8xf32>
    %cst_26 = arith.constant 2.000000e+00 : f32
    %56 = vector.broadcast %cst_26 : f32 to vector<8x8xf32>
    %57 = arith.mulf %56, %53 : vector<8x8xf32>
    %58 = math.exp %57 : vector<8x8xf32>
    %cst_27 = arith.constant 2.000000e+00 : f32
    %59 = vector.broadcast %cst_27 : f32 to vector<8x8xf32>
    %60 = arith.mulf %59, %54 : vector<8x8xf32>
    %61 = math.exp %60 : vector<8x8xf32>
    %cst_28 = arith.constant 2.000000e+00 : f32
    %62 = vector.broadcast %cst_28 : f32 to vector<8x8xf32>
    %63 = arith.mulf %62, %55 : vector<8x8xf32>
    %64 = math.exp %63 : vector<8x8xf32>
    %cst_29 = arith.constant 2.000000e+00 : f32
    %65 = vector.broadcast %cst_29 : f32 to vector<8x8xf32>
    %66 = arith.mulf %65, %53 : vector<8x8xf32>
    %cst_30 = arith.constant dense<0.000000e+00> : vector<8xf32>
    %67 = vector.multi_reduction <add>, %66, %cst_30 [1] : vector<8x8xf32> to vector<8xf32>
    %68 = vector.shape_cast %67 : vector<8xf32> to vector<8x1xf32>
    %cst_31 = arith.constant 2.000000e+00 : f32
    %69 = vector.broadcast %cst_31 : f32 to vector<8x8xf32>
    %70 = arith.mulf %69, %54 : vector<8x8xf32>
    %cst_32 = arith.constant dense<0.000000e+00> : vector<8xf32>
    %71 = vector.multi_reduction <add>, %70, %cst_32 [1] : vector<8x8xf32> to vector<8xf32>
    %72 = vector.shape_cast %71 : vector<8xf32> to vector<8x1xf32>
    %cst_33 = arith.constant 2.000000e+00 : f32
    %73 = vector.broadcast %cst_33 : f32 to vector<8x8xf32>
    %74 = arith.mulf %73, %55 : vector<8x8xf32>
    %cst_34 = arith.constant dense<0.000000e+00> : vector<8xf32>
    %75 = vector.multi_reduction <add>, %74, %cst_34 [1] : vector<8x8xf32> to vector<8xf32>
    %76 = vector.shape_cast %75 : vector<8xf32> to vector<8x1xf32>
    %cst_35 = arith.constant 5.54517746 : f32
    %77 = vector.broadcast %cst_35 : f32 to vector<8x1xf32>
    %78 = arith.addf %77, %68 : vector<8x1xf32>
    %cst_36 = arith.constant -5.000000e-01 : f32
    %79 = vector.broadcast %cst_36 : f32 to vector<8x1xf32>
    %80 = arith.mulf %79, %78 : vector<8x1xf32>
    %cst_37 = arith.constant 5.54517746 : f32
    %81 = vector.broadcast %cst_37 : f32 to vector<8x1xf32>
    %82 = arith.addf %81, %72 : vector<8x1xf32>
    %cst_38 = arith.constant -5.000000e-01 : f32
    %83 = vector.broadcast %cst_38 : f32 to vector<8x1xf32>
    %84 = arith.mulf %83, %82 : vector<8x1xf32>
    %cst_39 = arith.constant 5.54517746 : f32
    %85 = vector.broadcast %cst_39 : f32 to vector<8x1xf32>
    %86 = arith.addf %85, %76 : vector<8x1xf32>
    %cst_40 = arith.constant -5.000000e-01 : f32
    %87 = vector.broadcast %cst_40 : f32 to vector<8x1xf32>
    %88 = arith.mulf %87, %86 : vector<8x1xf32>
    %89 = arith.subf %50, %51 : vector<8x8xf32>
    %90 = arith.addf %58, %61 : vector<8x8xf32>
    %91 = arith.mulf %89, %89 : vector<8x8xf32>
    %92 = arith.divf %91, %90 : vector<8x8xf32>
    %cst_41 = arith.constant dense<0.000000e+00> : vector<8xf32>
    %93 = vector.multi_reduction <add>, %92, %cst_41 [1] : vector<8x8xf32> to vector<8xf32>
    %94 = vector.shape_cast %93 : vector<8xf32> to vector<8x1xf32>
    %95 = math.log %90 : vector<8x8xf32>
    %cst_42 = arith.constant dense<0.000000e+00> : vector<8xf32>
    %96 = vector.multi_reduction <add>, %95, %cst_42 [1] : vector<8x8xf32> to vector<8xf32>
    %97 = vector.shape_cast %96 : vector<8xf32> to vector<8x1xf32>
    %98 = arith.addf %94, %97 : vector<8x1xf32>
    %cst_43 = arith.constant -5.000000e-01 : f32
    %99 = vector.broadcast %cst_43 : f32 to vector<8x1xf32>
    %100 = arith.mulf %99, %98 : vector<8x1xf32>
    %101 = arith.subf %50, %52 : vector<8x8xf32>
    %102 = arith.addf %58, %64 : vector<8x8xf32>
    %103 = arith.mulf %101, %101 : vector<8x8xf32>
    %104 = arith.divf %103, %102 : vector<8x8xf32>
    %cst_44 = arith.constant dense<0.000000e+00> : vector<8xf32>
    %105 = vector.multi_reduction <add>, %104, %cst_44 [1] : vector<8x8xf32> to vector<8xf32>
    %106 = vector.shape_cast %105 : vector<8xf32> to vector<8x1xf32>
    %107 = math.log %102 : vector<8x8xf32>
    %cst_45 = arith.constant dense<0.000000e+00> : vector<8xf32>
    %108 = vector.multi_reduction <add>, %107, %cst_45 [1] : vector<8x8xf32> to vector<8xf32>
    %109 = vector.shape_cast %108 : vector<8xf32> to vector<8x1xf32>
    %110 = arith.addf %106, %109 : vector<8x1xf32>
    %cst_46 = arith.constant -5.000000e-01 : f32
    %111 = vector.broadcast %cst_46 : f32 to vector<8x1xf32>
    %112 = arith.mulf %111, %110 : vector<8x1xf32>
    %113 = arith.subf %51, %52 : vector<8x8xf32>
    %114 = arith.addf %61, %64 : vector<8x8xf32>
    %115 = arith.mulf %113, %113 : vector<8x8xf32>
    %116 = arith.divf %115, %114 : vector<8x8xf32>
    %cst_47 = arith.constant dense<0.000000e+00> : vector<8xf32>
    %117 = vector.multi_reduction <add>, %116, %cst_47 [1] : vector<8x8xf32> to vector<8xf32>
    %118 = vector.shape_cast %117 : vector<8xf32> to vector<8x1xf32>
    %119 = math.log %114 : vector<8x8xf32>
    %cst_48 = arith.constant dense<0.000000e+00> : vector<8xf32>
    %120 = vector.multi_reduction <add>, %119, %cst_48 [1] : vector<8x8xf32> to vector<8xf32>
    %121 = vector.shape_cast %120 : vector<8xf32> to vector<8x1xf32>
    %122 = arith.addf %118, %121 : vector<8x1xf32>
    %cst_49 = arith.constant -5.000000e-01 : f32
    %123 = vector.broadcast %cst_49 : f32 to vector<8x1xf32>
    %124 = arith.mulf %123, %122 : vector<8x1xf32>
    %125 = arith.maximumf %80, %84 : vector<8x1xf32>
    %126 = arith.maximumf %125, %88 : vector<8x1xf32>
    %127 = arith.maximumf %126, %100 : vector<8x1xf32>
    %128 = arith.maximumf %127, %112 : vector<8x1xf32>
    %129 = arith.maximumf %128, %124 : vector<8x1xf32>
    %cst_50 = arith.constant 0.000000e+00 : f32
    %130 = vector.broadcast %cst_50 : f32 to vector<8x1xf32>
    %131 = arith.subf %80, %129 : vector<8x1xf32>
    %132 = math.exp %131 : vector<8x1xf32>
    %cst_51 = arith.constant 1.000000e+00 : f32
    %133 = vector.broadcast %cst_51 : f32 to vector<8x1xf32>
    %134 = arith.mulf %133, %132 : vector<8x1xf32>
    %135 = arith.addf %130, %134 : vector<8x1xf32>
    %136 = arith.subf %84, %129 : vector<8x1xf32>
    %137 = math.exp %136 : vector<8x1xf32>
    %cst_52 = arith.constant 1.000000e+00 : f32
    %138 = vector.broadcast %cst_52 : f32 to vector<8x1xf32>
    %139 = arith.mulf %138, %137 : vector<8x1xf32>
    %140 = arith.addf %135, %139 : vector<8x1xf32>
    %141 = arith.subf %88, %129 : vector<8x1xf32>
    %142 = math.exp %141 : vector<8x1xf32>
    %cst_53 = arith.constant 1.000000e+00 : f32
    %143 = vector.broadcast %cst_53 : f32 to vector<8x1xf32>
    %144 = arith.mulf %143, %142 : vector<8x1xf32>
    %145 = arith.addf %140, %144 : vector<8x1xf32>
    %146 = arith.subf %100, %129 : vector<8x1xf32>
    %147 = math.exp %146 : vector<8x1xf32>
    %cst_54 = arith.constant 2.000000e+00 : f32
    %148 = vector.broadcast %cst_54 : f32 to vector<8x1xf32>
    %149 = arith.mulf %148, %147 : vector<8x1xf32>
    %150 = arith.addf %145, %149 : vector<8x1xf32>
    %151 = arith.subf %112, %129 : vector<8x1xf32>
    %152 = math.exp %151 : vector<8x1xf32>
    %cst_55 = arith.constant 2.000000e+00 : f32
    %153 = vector.broadcast %cst_55 : f32 to vector<8x1xf32>
    %154 = arith.mulf %153, %152 : vector<8x1xf32>
    %155 = arith.addf %150, %154 : vector<8x1xf32>
    %156 = arith.subf %124, %129 : vector<8x1xf32>
    %157 = math.exp %156 : vector<8x1xf32>
    %cst_56 = arith.constant 2.000000e+00 : f32
    %158 = vector.broadcast %cst_56 : f32 to vector<8x1xf32>
    %159 = arith.mulf %158, %157 : vector<8x1xf32>
    %160 = arith.addf %155, %159 : vector<8x1xf32>
    %cst_57 = arith.constant 0.000000e+00 : f32
    %161 = vector.broadcast %cst_57 : f32 to vector<8x1xf32>
    %162 = arith.subf %161, %129 : vector<8x1xf32>
    %cst_58 = arith.constant 9.000000e+00 : f32
    %163 = vector.broadcast %cst_58 : f32 to vector<8x1xf32>
    %164 = arith.divf %160, %163 : vector<8x1xf32>
    %165 = math.log %164 : vector<8x1xf32>
    %166 = arith.subf %162, %165 : vector<8x1xf32>
    %cst_59 = arith.constant 0.000000e+00 : f32
    %167 = vector.broadcast %cst_59 : f32 to vector<8x1xf32>
    %168 = arith.addf %167, %68 : vector<8x1xf32>
    %169 = arith.addf %168, %72 : vector<8x1xf32>
    %170 = arith.addf %169, %76 : vector<8x1xf32>
    %cst_60 = arith.constant 3.000000e+00 : f32
    %171 = vector.broadcast %cst_60 : f32 to vector<8x1xf32>
    %172 = arith.divf %170, %171 : vector<8x1xf32>
    %cst_61 = arith.constant 5.000000e-01 : f32
    %173 = vector.broadcast %cst_61 : f32 to vector<8x1xf32>
    %174 = arith.mulf %172, %173 : vector<8x1xf32>
    %cst_62 = arith.constant 2.77258873 : f32
    %175 = vector.broadcast %cst_62 : f32 to vector<8x1xf32>
    %176 = arith.addf %174, %175 : vector<8x1xf32>
    %177 = arith.subf %166, %176 : vector<8x1xf32>
    %178 = math.absf %177 : vector<8x1xf32>
    %c48_i32_63 = arith.constant 48 : i32
    %179 = vector.broadcast %c48_i32_63 : i32 to vector<8x128xi32>
    %180 = arith.cmpi eq, %39, %179 : vector<8x128xi32>
    %181 = vector.shape_cast %178 : vector<8x1xf32> to vector<8x1xf32>
    %182 = vector.broadcast %181 : vector<8x1xf32> to vector<8x128xf32>
    %183 = arith.select %180, %182, %49 : vector<8x128xi1>, vector<8x128xf32>
    %c0_64 = arith.constant 0 : index
    %c0_65 = arith.constant 0 : index
    %184 = vector.load %arg6[%c0_64, %c0_65] : memref<8x128xf32, #tpu.memory_space<vmem>>, vector<8x128xf32>
    tpu.vector_store %arg6[%c0_64, %c0_65], %183 {strides = array<i32>} : memref<8x128xf32, #tpu.memory_space<vmem>>, vector<8x128xf32>,
    return
  }
}

</mosaic_0001>

<llo_original>
// kernel: ensemble_stochastic_linear_forward.1
$region0: #{ensemble_stochastic_linear_forward.1}
  #allocation0 [shape = 'u32[]', space=smem, size = 0x4, offset = 0x4, fixed_abs, tag = 'smem constant byte address 0x4 - core index']
  #allocation1 [shape = 'u32[144,128]{1,0:T(1,128)}', space=vmem, size = 0x12000, scoped, tag = 'internal scratch']
  %s0 = inlined_call_operand.vmem [shape: f32[8,128], index: 0, kind: input, shape index: {}]
  %s1 = inlined_call_operand.vmem [shape: f32[128,128], index: 1, kind: input, shape index: {}]
  %s2 = inlined_call_operand.hbm [shape: f32[128,256], index: 2, kind: input, shape index: {}]
  %s3 = inlined_call_operand.hbm [shape: f32[256,384], index: 3, kind: input, shape index: {}]
  %s4 = inlined_call_operand.hbm [shape: f32[384,128], index: 4, kind: input, shape index: {}]
  %s5 = inlined_call_operand.hbm [shape: f32[128,128], index: 5, kind: input, shape index: {}]
  %s6 = inlined_call_operand.vmem [shape: f32[8,128], index: 6, kind: output, shape index: {}]
  %s7 = sld [smem:[#allocation0]]
  $region50: #{ensemble_stochastic_linear_forward.1} parent=0
    _
  %s9 = ssub.s32 1, %s7
  %s10 = scalar_select 0, %s9, %s7
  $region1: #{ensemble_stochastic_linear_forward.1} parent=0
    #allocation2 [shape = 'u8[131072]{0}', space=vmem, size = 0x20000, scoped, tag = 'input window, operand 2, single buffered']
    #allocation3 [shape = 's32[1]{0}', space=sflag, size = 0x4, scoped, tag = 'scoped memory for ensemble_stochastic_linear_forward.1']
    #allocation4 [shape = 'u8[393216]{0}', space=vmem, size = 0x60000, scoped, tag = 'input window, operand 3, single buffered']
    #allocation5 [shape = 's32[1]{0}', space=sflag, size = 0x4, scoped, tag = 'scoped memory for ensemble_stochastic_linear_forward.1']
    #allocation6 [shape = 'u8[196608]{0}', space=vmem, size = 0x30000, scoped, tag = 'input window, operand 4, single buffered']
    #allocation7 [shape = 'u8[65536]{0}', space=vmem, size = 0x10000, scoped, tag = 'input window, operand 5, single buffered']
    #allocation8 [shape = 's32[1]{0}', space=sflag, size = 0x4, scoped, tag = 'scoped memory for ensemble_stochastic_linear_forward.1']
    %11 = vsyncpa [#allocation3], 0
    %12 = vsyncpa [#allocation5], 0
    %13 = vsyncpa [#allocation8], 0
    // Predicated region
    $region2: #{ensemble_stochastic_linear_forward.1} parent=1 // pred_check
      _
    $region3: #{ensemble_stochastic_linear_forward.1} parent=1 // pred_check_branch
      %15 = sbr.rel (0) target = $region5
    $region4: #{ensemble_stochastic_linear_forward.1} parent=1 // pred_region
      _
    $region5: #{ensemble_stochastic_linear_forward.1} parent=1 // pred_fallthru
      _
    // Predicated region
    $region6: #{ensemble_stochastic_linear_forward.1} parent=1 // pred_check
      _
    $region7: #{ensemble_stochastic_linear_forward.1} parent=1 // pred_check_branch
      %17 = sbr.rel (0) target = $region9
    $region8: #{ensemble_stochastic_linear_forward.1} parent=1 // pred_region
      _
    $region9: #{ensemble_stochastic_linear_forward.1} parent=1 // pred_fallthru
      _
    // Predicated region
    $region10: #{ensemble_stochastic_linear_forward.1} parent=1 // pred_check
      _
    $region11: #{ensemble_stochastic_linear_forward.1} parent=1 // pred_check_branch
      %19 = sbr.rel (0) target = $region13
    $region12: #{ensemble_stochastic_linear_forward.1} parent=1 // pred_region
      %s21 = ssub.s32 4096, 4096
      %22 = vsyncadd [#allocation3], %s21
      %s23 = sshll.u32 [#allocation2], 4
      %s24 = int_to_ptr.vmem [resolvable:$true] %s23
      %29 = dma.hbm_to_vmem [thread:$0]  %s2, 4096, %s24, [#allocation3], 256, 256, 16
    $region13: #{ensemble_stochastic_linear_forward.1} parent=1 // pred_fallthru
      _
    // Predicated region
    $region14: #{ensemble_stochastic_linear_forward.1} parent=1 // pred_check
      _
    $region15: #{ensemble_stochastic_linear_forward.1} parent=1 // pred_check_branch
      %31 = sbr.rel (0) target = $region17
    $region16: #{ensemble_stochastic_linear_forward.1} parent=1 // pred_region
      %s33 = ssub.s32 12288, 12288
      %34 = vsyncadd [#allocation5], %s33
      %s35 = sshll.u32 [#allocation4], 4
      %s36 = int_to_ptr.vmem [resolvable:$true] %s35
      %41 = dma.hbm_to_vmem [thread:$0]  %s3, 12288, %s36, [#allocation5], 384, 384, 24
    $region17: #{ensemble_stochastic_linear_forward.1} parent=1 // pred_fallthru
      _
    // Predicated region
    $region18: #{ensemble_stochastic_linear_forward.1} parent=1 // pred_check
      _
    $region19: #{ensemble_stochastic_linear_forward.1} parent=1 // pred_check_branch
      %43 = sbr.rel (0) target = $region21
    $region20: #{ensemble_stochastic_linear_forward.1} parent=1 // pred_region
      %s45 = ssub.s32 6144, 6144
      %46 = vsyncadd [#allocation5], %s45
      %s47 = sshll.u32 [#allocation6], 4
      %s48 = int_to_ptr.vmem [resolvable:$true] %s47
      %53 = dma.hbm_to_vmem [thread:$0]  %s4, 6144, %s48, [#allocation5], 128, 128, 8
    $region21: #{ensemble_stochastic_linear_forward.1} parent=1 // pred_fallthru
      _
    // Predicated region
    $region22: #{ensemble_stochastic_linear_forward.1} parent=1 // pred_check
      _
    $region23: #{ensemble_stochastic_linear_forward.1} parent=1 // pred_check_branch
      %55 = sbr.rel (0) target = $region25
    $region24: #{ensemble_stochastic_linear_forward.1} parent=1 // pred_region
      %s57 = ssub.s32 2048, 2048
      %58 = vsyncadd [#allocation8], %s57
      %s59 = sshll.u32 [#allocation7], 4
      %s60 = int_to_ptr.vmem [resolvable:$true] %s59
      %65 = dma.hbm_to_vmem [thread:$0]  %s5, 2048, %s60, [#allocation8], 128, 128, 8
    $region25: #{ensemble_stochastic_linear_forward.1} parent=1 // pred_fallthru
      _
    // Predicated region
    $region26: #{ensemble_stochastic_linear_forward.1} parent=1 // pred_check
      _
    $region27: #{ensemble_stochastic_linear_forward.1} parent=1 // pred_check_branch
      %67 = sbr.rel (0) target = $region29
    $region28: #{ensemble_stochastic_linear_forward.1} parent=1 // pred_region
      %68 = dma.done [#allocation3], 4096
    $region29: #{ensemble_stochastic_linear_forward.1} parent=1 // pred_fallthru
      _
    // Predicated region
    $region30: #{ensemble_stochastic_linear_forward.1} parent=1 // pred_check
      _
    $region31: #{ensemble_stochastic_linear_forward.1} parent=1 // pred_check_branch
      %70 = sbr.rel (0) target = $region33
    $region32: #{ensemble_stochastic_linear_forward.1} parent=1 // pred_region
      %71 = dma.done [#allocation5], 12288
    $region33: #{ensemble_stochastic_linear_forward.1} parent=1 // pred_fallthru
      _
    // Predicated region
    $region34: #{ensemble_stochastic_linear_forward.1} parent=1 // pred_check
      _
    $region35: #{ensemble_stochastic_linear_forward.1} parent=1 // pred_check_branch
      %73 = sbr.rel (0) target = $region37
    $region36: #{ensemble_stochastic_linear_forward.1} parent=1 // pred_region
      %74 = dma.done [#allocation5], 6144
    $region37: #{ensemble_stochastic_linear_forward.1} parent=1 // pred_fallthru
      _
    // Predicated region
    $region38: #{ensemble_stochastic_linear_forward.1} parent=1 // pred_check
      _
    $region39: #{ensemble_stochastic_linear_forward.1} parent=1 // pred_check_branch
      %76 = sbr.rel (0) target = $region41
    $region40: #{ensemble_stochastic_linear_forward.1} parent=1 // pred_region
      %77 = dma.done [#allocation8], 2048
    $region41: #{ensemble_stochastic_linear_forward.1} parent=1 // pred_fallthru
      _
    %v78 = vld [vmem:[%s0] sm:$0xff]
    %v79 = vld [vmem:[%s1] sm:$0xff]
    %v80 = vld [vmem:[%s1 + $0x8] sm:$0xff]
    %v81 = vld [vmem:[%s1 + $0x10] sm:$0xff]
    %v82 = vld [vmem:[%s1 + $0x18] sm:$0xff]
    %v83 = vld [vmem:[%s1 + $0x20] sm:$0xff]
    %v84 = vld [vmem:[%s1 + $0x28] sm:$0xff]
    %v85 = vld [vmem:[%s1 + $0x30] sm:$0xff]
    %v86 = vld [vmem:[%s1 + $0x38] sm:$0xff]
    %v87 = vld [vmem:[%s1 + $0x40] sm:$0xff]
    %v88 = vld [vmem:[%s1 + $0x48] sm:$0xff]
    %v89 = vld [vmem:[%s1 + $0x50] sm:$0xff]
    %v90 = vld [vmem:[%s1 + $0x58] sm:$0xff]
    %v91 = vld [vmem:[%s1 + $0x60] sm:$0xff]
    %v92 = vld [vmem:[%s1 + $0x68] sm:$0xff]
    %v93 = vld [vmem:[%s1 + $0x70] sm:$0xff]
    %v94 = vld [vmem:[%s1 + $0x78] sm:$0xff]
    %95 = vmatprep.subr.mxu0 0.0
    %96 = vmatpush1.msra.mxu0 %v79
    %97 = vmatprep.subr.mxu0 0.0
    %98 = vmatpush1.msra.mxu0 %v80
    %99 = vmatprep.subr.mxu0 0.0
    %100 = vmatpush1.msra.mxu0 %v81
    %101 = vmatprep.subr.mxu0 0.0
    %102 = vmatpush1.msra.mxu0 %v82
    %103 = vmatprep.subr.mxu0 0.0
    %104 = vmatpush1.msra.mxu0 %v83
    %105 = vmatprep.subr.mxu0 0.0
    %106 = vmatpush1.msra.mxu0 %v84
    %107 = vmatprep.subr.mxu0 0.0
    %108 = vmatpush1.msra.mxu0 %v85
    %109 = vmatprep.subr.mxu0 0.0
    %110 = vmatpush1.msra.mxu0 %v86
    %111 = vmatprep.subr.mxu0 0.0
    %112 = vmatpush1.msra.mxu0 %v87
    %113 = vmatprep.subr.mxu0 0.0
    %114 = vmatpush1.msra.mxu0 %v88
    %115 = vmatprep.subr.mxu0 0.0
    %116 = vmatpush1.msra.mxu0 %v89
    %117 = vmatprep.subr.mxu0 0.0
    %118 = vmatpush1.msra.mxu0 %v90
    %119 = vmatprep.subr.mxu0 0.0
    %120 = vmatpush1.msra.mxu0 %v91
    %121 = vmatprep.subr.mxu0 0.0
    %122 = vmatpush1.msra.mxu0 %v92
    %123 = vmatprep.subr.mxu0 0.0
    %124 = vmatpush1.msra.mxu0 %v93
    %125 = vmatprep.subr.mxu0 0.0
    %126 = vmatpush1.msra.mxu0 %v94
    %127 = vmatprep.subr.mxu0 0.0
    %128 = vmatpush1.msra.mxu0 0.0
    %129 = vmatprep.subr.mxu0 0.0
    %130 = vmatpush1.msra.mxu0 0.0
    %131 = vmatprep.subr.mxu0 0.0
    %132 = vmatpush1.msra.mxu0 0.0
    %133 = vmatprep.subr.mxu0 0.0
    %134 = vmatpush1.msra.mxu0 0.0
    %135 = vmatprep.subr.mxu0 0.0
    %136 = vmatpush1.msra.mxu0 0.0
    %137 = vmatprep.subr.mxu0 0.0
    %138 = vmatpush1.msra.mxu0 0.0
    %139 = vmatprep.subr.mxu0 0.0
    %140 = vmatpush1.msra.mxu0 0.0
    %141 = vmatprep.subr.mxu0 0.0
    %142 = vmatpush1.msra.mxu0 0.0
    %143 = vmatprep.subr.mxu0 0.0
    %144 = vmatpush1.msra.mxu0 0.0
    %145 = vmatprep.subr.mxu0 0.0
    %146 = vmatpush1.msra.mxu0 0.0
    %147 = vmatprep.subr.mxu0 0.0
    %148 = vmatpush1.msra.mxu0 0.0
    %149 = vmatprep.subr.mxu0 0.0
    %150 = vmatpush1.msra.mxu0 0.0
    %151 = vmatprep.subr.mxu0 0.0
    %152 = vmatpush1.msra.mxu0 0.0
    %153 = vmatprep.subr.mxu0 0.0
    %154 = vmatpush1.msra.mxu0 0.0
    %155 = vmatprep.subr.mxu0 0.0
    %156 = vmatpush1.msra.mxu0 0.0
    %157 = vmatprep.subr.mxu0 0.0
    %158 = vmatpush1.msra.mxu0 0.0
    %159 = vmatprep.mubr.f32.mxu0 0.0
    %160 = vmatmul.mubr.f32.gmra.mrb[0].mxu0 %v78
    %v161 = vpop.f32.mrb[0].mxu0
    %v162 = vadd.f32 0.0, %v161
    %v163 = vpop.f32.mrb[0].mxu0
    %164 = vdwg.mxu0
    %v165 = vmax.f32 %v162, 0.0
    %v166 = vlaneseq
    %v167 = vand.u32 %v166, 127
    %vm168 = vcmp.eq.s32.totalorder %v167, 96
    %v169 = vsel %vm168, 1.0, %v165
    %v170 = vld [vmem:[#allocation2] sm:$0xff]
    %v171 = vld [vmem:[#allocation2 + $0x8] sm:$0xff]
    %v172 = vld [vmem:[#allocation2 + $0x10] sm:$0xff]
    %v173 = vld [vmem:[#allocation2 + $0x18] sm:$0xff]
    %v174 = vld [vmem:[#allocation2 + $0x20] sm:$0xff]
    %v175 = vld [vmem:[#allocation2 + $0x28] sm:$0xff]
    %v176 = vld [vmem:[#allocation2 + $0x30] sm:$0xff]
    %v177 = vld [vmem:[#allocation2 + $0x38] sm:$0xff]
    %v178 = vld [vmem:[#allocation2 + $0x40] sm:$0xff]
    %v179 = vld [vmem:[#allocation2 + $0x48] sm:$0xff]
    %v180 = vld [vmem:[#allocation2 + $0x50] sm:$0xff]
    %v181 = vld [vmem:[#allocation2 + $0x58] sm:$0xff]
    %v182 = vld [vmem:[#allocation2 + $0x60] sm:$0xff]
    %v183 = vld [vmem:[#allocation2 + $0x68] sm:$0xff]
    %v184 = vld [vmem:[#allocation2 + $0x70] sm:$0xff]
    %v185 = vld [vmem:[#allocation2 + $0x78] sm:$0xff]
    %v186 = vld [vmem:[#allocation2 + $0x80] sm:$0xff]
    %v187 = vld [vmem:[#allocation2 + $0x88] sm:$0xff]
    %v188 = vld [vmem:[#allocation2 + $0x90] sm:$0xff]
    %v189 = vld [vmem:[#allocation2 + $0x98] sm:$0xff]
    %v190 = vld [vmem:[#allocation2 + $0xa0] sm:$0xff]
    %v191 = vld [vmem:[#allocation2 + $0xa8] sm:$0xff]
    %v192 = vld [vmem:[#allocation2 + $0xb0] sm:$0xff]
    %v193 = vld [vmem:[#allocation2 + $0xb8] sm:$0xff]
    %v194 = vld [vmem:[#allocation2 + $0xc0] sm:$0xff]
    %v195 = vld [vmem:[#allocation2 + $0xc8] sm:$0xff]
    %v196 = vld [vmem:[#allocation2 + $0xd0] sm:$0xff]
    %v197 = vld [vmem:[#allocation2 + $0xd8] sm:$0xff]
    %v198 = vld [vmem:[#allocation2 + $0xe0] sm:$0xff]
    %v199 = vld [vmem:[#allocation2 + $0xe8] sm:$0xff]
    %v200 = vld [vmem:[#allocation2 + $0xf0] sm:$0xff]
    %v201 = vld [vmem:[#allocation2 + $0xf8] sm:$0xff]
    %202 = vmatprep.subr.mxu0 %v171
    %203 = vmatpush1.msra.mxu0 %v170
    %204 = vmatprep.subr.mxu0 %v173
    %205 = vmatpush1.msra.mxu0 %v172
    %206 = vmatprep.subr.mxu0 %v175
    %207 = vmatpush1.msra.mxu0 %v174
    %208 = vmatprep.subr.mxu0 %v177
    %209 = vmatpush1.msra.mxu0 %v176
    %210 = vmatprep.subr.mxu0 %v179
    %211 = vmatpush1.msra.mxu0 %v178
    %212 = vmatprep.subr.mxu0 %v181
    %213 = vmatpush1.msra.mxu0 %v180
    %214 = vmatprep.subr.mxu0 %v183
    %215 = vmatpush1.msra.mxu0 %v182
    %216 = vmatprep.subr.mxu0 %v185
    %217 = vmatpush1.msra.mxu0 %v184
    %218 = vmatprep.subr.mxu0 %v187
    %219 = vmatpush1.msra.mxu0 %v186
    %220 = vmatprep.subr.mxu0 %v189
    %221 = vmatpush1.msra.mxu0 %v188
    %222 = vmatprep.subr.mxu0 %v191
    %223 = vmatpush1.msra.mxu0 %v190
    %224 = vmatprep.subr.mxu0 %v193
    %225 = vmatpush1.msra.mxu0 %v192
    %226 = vmatprep.subr.mxu0 %v195
    %227 = vmatpush1.msra.mxu0 %v194
    %228 = vmatprep.subr.mxu0 %v197
    %229 = vmatpush1.msra.mxu0 %v196
    %230 = vmatprep.subr.mxu0 %v199
    %231 = vmatpush1.msra.mxu0 %v198
    %232 = vmatprep.subr.mxu0 %v201
    %233 = vmatpush1.msra.mxu0 %v200
    %234 = vmatprep.subr.mxu0 0.0
    %235 = vmatpush1.msra.mxu0 0.0
    %236 = vmatprep.subr.mxu0 0.0
    %237 = vmatpush1.msra.mxu0 0.0
    %238 = vmatprep.subr.mxu0 0.0
    %239 = vmatpush1.msra.mxu0 0.0
    %240 = vmatprep.subr.mxu0 0.0
    %241 = vmatpush1.msra.mxu0 0.0
    %242 = vmatprep.subr.mxu0 0.0
    %243 = vmatpush1.msra.mxu0 0.0
    %244 = vmatprep.subr.mxu0 0.0
    %245 = vmatpush1.msra.mxu0 0.0
    %246 = vmatprep.subr.mxu0 0.0
    %247 = vmatpush1.msra.mxu0 0.0
    %248 = vmatprep.subr.mxu0 0.0
    %249 = vmatpush1.msra.mxu0 0.0
    %250 = vmatprep.subr.mxu0 0.0
    %251 = vmatpush1.msra.mxu0 0.0
    %252 = vmatprep.subr.mxu0 0.0
    %253 = vmatpush1.msra.mxu0 0.0
    %254 = vmatprep.subr.mxu0 0.0
    %255 = vmatpush1.msra.mxu0 0.0
    %256 = vmatprep.subr.mxu0 0.0
    %257 = vmatpush1.msra.mxu0 0.0
    %258 = vmatprep.subr.mxu0 0.0
    %259 = vmatpush1.msra.mxu0 0.0
    %260 = vmatprep.subr.mxu0 0.0
    %261 = vmatpush1.msra.mxu0 0.0
    %262 = vmatprep.subr.mxu0 0.0
    %263 = vmatpush1.msra.mxu0 0.0
    %264 = vmatprep.subr.mxu0 0.0
    %265 = vmatpush1.msra.mxu0 0.0
    %266 = vmatprep.mubr.f32.mxu0 0.0
    %267 = vmatmul.mubr.f32.gmra.mrb[0].mxu0 %v169
    %v268 = vpop.f32.mrb[0].mxu0
    %v269 = vadd.f32 0.0, %v268
    %v270 = vpop.f32.mrb[0].mxu0
    %v271 = vadd.f32 0.0, %v270
    %272 = vdwg.mxu0
    %v273 = vmax.f32 %v269, 0.0
    %v274 = vmax.f32 %v271, 0.0
    %v275 = vadd.s32 %v167, 128
    %vm276 = vcmp.eq.s32.totalorder %v167, 192
    %vm277 = vcmp.eq.s32.totalorder %v275, 192
    %v278 = vsel %vm276, 1.0, %v273
    %v279 = vsel %vm277, 1.0, %v274
    %v280 = vld [vmem:[#allocation4] sm:$0xff]
    %v281 = vld [vmem:[#allocation4 + $0x8] sm:$0xff]
    %v282 = vld [vmem:[#allocation4 + $0x10] sm:$0xff]
    %v283 = vld [vmem:[#allocation4 + $0x18] sm:$0xff]
    %v284 = vld [vmem:[#allocation4 + $0x20] sm:$0xff]
    %v285 = vld [vmem:[#allocation4 + $0x28] sm:$0xff]
    %v286 = vld [vmem:[#allocation4 + $0x30] sm:$0xff]
    %v287 = vld [vmem:[#allocation4 + $0x38] sm:$0xff]
    %v288 = vld [vmem:[#allocation4 + $0x40] sm:$0xff]
    %v289 = vld [vmem:[#allocation4 + $0x48] sm:$0xff]
    %v290 = vld [vmem:[#allocation4 + $0x50] sm:$0xff]
    %v291 = vld [vmem:[#allocation4 + $0x58] sm:$0xff]
    %v292 = vld [vmem:[#allocation4 + $0x60] sm:$0xff]
    %v293 = vld [vmem:[#allocation4 + $0x68] sm:$0xff]
    %v294 = vld [vmem:[#allocation4 + $0x70] sm:$0xff]
    %v295 = vld [vmem:[#allocation4 + $0x78] sm:$0xff]
    %v296 = vld [vmem:[#allocation4 + $0x80] sm:$0xff]
    %v297 = vld [vmem:[#allocation4 + $0x88] sm:$0xff]
    %v298 = vld [vmem:[#allocation4 + $0x90] sm:$0xff]
    %v299 = vld [vmem:[#allocation4 + $0x98] sm:$0xff]
    %v300 = vld [vmem:[#allocation4 + $0xa0] sm:$0xff]
    %v301 = vld [vmem:[#allocation4 + $0xa8] sm:$0xff]
    %v302 = vld [vmem:[#allocation4 + $0xb0] sm:$0xff]
    %v303 = vld [vmem:[#allocation4 + $0xb8] sm:$0xff]
    %v304 = vld [vmem:[#allocation4 + $0xc0] sm:$0xff]
    %v305 = vld [vmem:[#allocation4 + $0xc8] sm:$0xff]
    %v306 = vld [vmem:[#allocation4 + $0xd0] sm:$0xff]
    %v307 = vld [vmem:[#allocation4 + $0xd8] sm:$0xff]
    %v308 = vld [vmem:[#allocation4 + $0xe0] sm:$0xff]
    %v309 = vld [vmem:[#allocation4 + $0xe8] sm:$0xff]
    %v310 = vld [vmem:[#allocation4 + $0xf0] sm:$0xff]
    %v311 = vld [vmem:[#allocation4 + $0xf8] sm:$0xff]
    %v312 = vld [vmem:[#allocation4 + $0x100] sm:$0xff]
    %v313 = vld [vmem:[#allocation4 + $0x108] sm:$0xff]
    %v314 = vld [vmem:[#allocation4 + $0x110] sm:$0xff]
    %v315 = vld [vmem:[#allocation4 + $0x118] sm:$0xff]
    %v316 = vld [vmem:[#allocation4 + $0x120] sm:$0xff]
    %v317 = vld [vmem:[#allocation4 + $0x128] sm:$0xff]
    %v318 = vld [vmem:[#allocation4 + $0x130] sm:$0xff]
    %v319 = vld [vmem:[#allocation4 + $0x138] sm:$0xff]
    %v320 = vld [vmem:[#allocation4 + $0x140] sm:$0xff]
    %v321 = vld [vmem:[#allocation4 + $0x148] sm:$0xff]
    %v322 = vld [vmem:[#allocation4 + $0x150] sm:$0xff]
    %v323 = vld [vmem:[#allocation4 + $0x158] sm:$0xff]
    %v324 = vld [vmem:[#allocation4 + $0x160] sm:$0xff]
    %v325 = vld [vmem:[#allocation4 + $0x168] sm:$0xff]
    %v326 = vld [vmem:[#allocation4 + $0x170] sm:$0xff]
    %v327 = vld [vmem:[#allocation4 + $0x178] sm:$0xff]
    %v328 = vld [vmem:[#allocation4 + $0x180] sm:$0xff]
    %v329 = vld [vmem:[#allocation4 + $0x188] sm:$0xff]
    %v330 = vld [vmem:[#allocation4 + $0x190] sm:$0xff]
    %v331 = vld [vmem:[#allocation4 + $0x198] sm:$0xff]
    %v332 = vld [vmem:[#allocation4 + $0x1a0] sm:$0xff]
    %v333 = vld [vmem:[#allocation4 + $0x1a8] sm:$0xff]
    %v334 = vld [vmem:[#allocation4 + $0x1b0] sm:$0xff]
    %v335 = vld [vmem:[#allocation4 + $0x1b8] sm:$0xff]
    %v336 = vld [vmem:[#allocation4 + $0x1c0] sm:$0xff]
    %v337 = vld [vmem:[#allocation4 + $0x1c8] sm:$0xff]
    %v338 = vld [vmem:[#allocation4 + $0x1d0] sm:$0xff]
    %v339 = vld [vmem:[#allocation4 + $0x1d8] sm:$0xff]
    %v340 = vld [vmem:[#allocation4 + $0x1e0] sm:$0xff]
    %v341 = vld [vmem:[#allocation4 + $0x1e8] sm:$0xff]
    %v342 = vld [vmem:[#allocation4 + $0x1f0] sm:$0xff]
    %v343 = vld [vmem:[#allocation4 + $0x1f8] sm:$0xff]
    %v344 = vld [vmem:[#allocation4 + $0x200] sm:$0xff]
    %v345 = vld [vmem:[#allocation4 + $0x208] sm:$0xff]
    %v346 = vld [vmem:[#allocation4 + $0x210] sm:$0xff]
    %v347 = vld [vmem:[#allocation4 + $0x218] sm:$0xff]
    %v348 = vld [vmem:[#allocation4 + $0x220] sm:$0xff]
    %v349 = vld [vmem:[#allocation4 + $0x228] sm:$0xff]
    %v350 = vld [vmem:[#allocation4 + $0x230] sm:$0xff]
    %v351 = vld [vmem:[#allocation4 + $0x238] sm:$0xff]
    %v352 = vld [vmem:[#allocation4 + $0x240] sm:$0xff]
    %v353 = vld [vmem:[#allocation4 + $0x248] sm:$0xff]
    %v354 = vld [vmem:[#allocation4 + $0x250] sm:$0xff]
    %v355 = vld [vmem:[#allocation4 + $0x258] sm:$0xff]
    %v356 = vld [vmem:[#allocation4 + $0x260] sm:$0xff]
    %v357 = vld [vmem:[#allocation4 + $0x268] sm:$0xff]
    %v358 = vld [vmem:[#allocation4 + $0x270] sm:$0xff]
    %v359 = vld [vmem:[#allocation4 + $0x278] sm:$0xff]
    %v360 = vld [vmem:[#allocation4 + $0x280] sm:$0xff]
    %v361 = vld [vmem:[#allocation4 + $0x288] sm:$0xff]
    %v362 = vld [vmem:[#allocation4 + $0x290] sm:$0xff]
    %v363 = vld [vmem:[#allocation4 + $0x298] sm:$0xff]
    %v364 = vld [vmem:[#allocation4 + $0x2a0] sm:$0xff]
    %v365 = vld [vmem:[#allocation4 + $0x2a8] sm:$0xff]
    %v366 = vld [vmem:[#allocation4 + $0x2b0] sm:$0xff]
    %v367 = vld [vmem:[#allocation4 + $0x2b8] sm:$0xff]
    %v368 = vld [vmem:[#allocation4 + $0x2c0] sm:$0xff]
    %v369 = vld [vmem:[#allocation4 + $0x2c8] sm:$0xff]
    %v370 = vld [vmem:[#allocation4 + $0x2d0] sm:$0xff]
    %v371 = vld [vmem:[#allocation4 + $0x2d8] sm:$0xff]
    %v372 = vld [vmem:[#allocation4 + $0x2e0] sm:$0xff]
    %v373 = vld [vmem:[#allocation4 + $0x2e8] sm:$0xff]
    %v374 = vld [vmem:[#allocation4 + $0x2f0] sm:$0xff]
    %v375 = vld [vmem:[#allocation4 + $0x2f8] sm:$0xff]
    %376 = vmatprep.subr.mxu0 %v281
    %377 = vmatpush1.msra.mxu0 %v280
    %378 = vmatprep.subr.mxu0 %v284
    %379 = vmatpush1.msra.mxu0 %v283
    %380 = vmatprep.subr.mxu0 %v287
    %381 = vmatpush1.msra.mxu0 %v286
    %382 = vmatprep.subr.mxu0 %v290
    %383 = vmatpush1.msra.mxu0 %v289
    %384 = vmatprep.subr.mxu0 %v293
    %385 = vmatpush1.msra.mxu0 %v292
    %386 = vmatprep.subr.mxu0 %v296
    %387 = vmatpush1.msra.mxu0 %v295
    %388 = vmatprep.subr.mxu0 %v299
    %389 = vmatpush1.msra.mxu0 %v298
    %390 = vmatprep.subr.mxu0 %v302
    %391 = vmatpush1.msra.mxu0 %v301
    %392 = vmatprep.subr.mxu0 %v305
    %393 = vmatpush1.msra.mxu0 %v304
    %394 = vmatprep.subr.mxu0 %v308
    %395 = vmatpush1.msra.mxu0 %v307
    %396 = vmatprep.subr.mxu0 %v311
    %397 = vmatpush1.msra.mxu0 %v310
    %398 = vmatprep.subr.mxu0 %v314
    %399 = vmatpush1.msra.mxu0 %v313
    %400 = vmatprep.subr.mxu0 %v317
    %401 = vmatpush1.msra.mxu0 %v316
    %402 = vmatprep.subr.mxu0 %v320
    %403 = vmatpush1.msra.mxu0 %v319
    %404 = vmatprep.subr.mxu0 %v323
    %405 = vmatpush1.msra.mxu0 %v322
    %406 = vmatprep.subr.mxu0 %v326
    %407 = vmatpush1.msra.mxu0 %v325
    %408 = vmatprep.subr.mxu0 %v329
    %409 = vmatpush1.msra.mxu0 %v328
    %410 = vmatprep.subr.mxu0 %v332
    %411 = vmatpush1.msra.mxu0 %v331
    %412 = vmatprep.subr.mxu0 %v335
    %413 = vmatpush1.msra.mxu0 %v334
    %414 = vmatprep.subr.mxu0 %v338
    %415 = vmatpush1.msra.mxu0 %v337
    %416 = vmatprep.subr.mxu0 %v341
    %417 = vmatpush1.msra.mxu0 %v340
    %418 = vmatprep.subr.mxu0 %v344
    %419 = vmatpush1.msra.mxu0 %v343
    %420 = vmatprep.subr.mxu0 %v347
    %421 = vmatpush1.msra.mxu0 %v346
    %422 = vmatprep.subr.mxu0 %v350
    %423 = vmatpush1.msra.mxu0 %v349
    %424 = vmatprep.subr.mxu0 %v353
    %425 = vmatpush1.msra.mxu0 %v352
    %426 = vmatprep.subr.mxu0 %v356
    %427 = vmatpush1.msra.mxu0 %v355
    %428 = vmatprep.subr.mxu0 %v359
    %429 = vmatpush1.msra.mxu0 %v358
    %430 = vmatprep.subr.mxu0 %v362
    %431 = vmatpush1.msra.mxu0 %v361
    %432 = vmatprep.subr.mxu0 %v365
    %433 = vmatpush1.msra.mxu0 %v364
    %434 = vmatprep.subr.mxu0 %v368
    %435 = vmatpush1.msra.mxu0 %v367
    %436 = vmatprep.subr.mxu0 %v371
    %437 = vmatpush1.msra.mxu0 %v370
    %438 = vmatprep.subr.mxu0 %v374
    %439 = vmatpush1.msra.mxu0 %v373
    %440 = vmatprep.mubr.f32.mxu0 %v279
    %441 = vmatmul.mubr.f32.gmra.mrb[0].mxu0 %v278
    %v442 = vpop.f32.mrb[0].mxu0
    %v443 = vadd.f32 0.0, %v442
    %v444 = vpop.f32.mrb[0].mxu0
    %v445 = vadd.f32 0.0, %v444
    %446 = vdwg.mxu0
    %447 = vmatprep.subr.mxu0 0.0
    %448 = vmatpush1.msra.mxu0 %v282
    %449 = vmatprep.subr.mxu0 0.0
    %450 = vmatpush1.msra.mxu0 %v285
    %451 = vmatprep.subr.mxu0 0.0
    %452 = vmatpush1.msra.mxu0 %v288
    %453 = vmatprep.subr.mxu0 0.0
    %454 = vmatpush1.msra.mxu0 %v291
    %455 = vmatprep.subr.mxu0 0.0
    %456 = vmatpush1.msra.mxu0 %v294
    %457 = vmatprep.subr.mxu0 0.0
    %458 = vmatpush1.msra.mxu0 %v297
    %459 = vmatprep.subr.mxu0 0.0
    %460 = vmatpush1.msra.mxu0 %v300
    %461 = vmatprep.subr.mxu0 0.0
    %462 = vmatpush1.msra.mxu0 %v303
    %463 = vmatprep.subr.mxu0 0.0
    %464 = vmatpush1.msra.mxu0 %v306
    %465 = vmatprep.subr.mxu0 0.0
    %466 = vmatpush1.msra.mxu0 %v309
    %467 = vmatprep.subr.mxu0 0.0
    %468 = vmatpush1.msra.mxu0 %v312
    %469 = vmatprep.subr.mxu0 0.0
    %470 = vmatpush1.msra.mxu0 %v315
    %471 = vmatprep.subr.mxu0 0.0
    %472 = vmatpush1.msra.mxu0 %v318
    %473 = vmatprep.subr.mxu0 0.0
    %474 = vmatpush1.msra.mxu0 %v321
    %475 = vmatprep.subr.mxu0 0.0
    %476 = vmatpush1.msra.mxu0 %v324
    %477 = vmatprep.subr.mxu0 0.0
    %478 = vmatpush1.msra.mxu0 %v327
    %479 = vmatprep.subr.mxu0 0.0
    %480 = vmatpush1.msra.mxu0 %v330
    %481 = vmatprep.subr.mxu0 0.0
    %482 = vmatpush1.msra.mxu0 %v333
    %483 = vmatprep.subr.mxu0 0.0
    %484 = vmatpush1.msra.mxu0 %v336
    %485 = vmatprep.subr.mxu0 0.0
    %486 = vmatpush1.msra.mxu0 %v339
    %487 = vmatprep.subr.mxu0 0.0
    %488 = vmatpush1.msra.mxu0 %v342
    %489 = vmatprep.subr.mxu0 0.0
    %490 = vmatpush1.msra.mxu0 %v345
    %491 = vmatprep.subr.mxu0 0.0
    %492 = vmatpush1.msra.mxu0 %v348
    %493 = vmatprep.subr.mxu0 0.0
    %494 = vmatpush1.msra.mxu0 %v351
    %495 = vmatprep.subr.mxu0 0.0
    %496 = vmatpush1.msra.mxu0 %v354
    %497 = vmatprep.subr.mxu0 0.0
    %498 = vmatpush1.msra.mxu0 %v357
    %499 = vmatprep.subr.mxu0 0.0
    %500 = vmatpush1.msra.mxu0 %v360
    %501 = vmatprep.subr.mxu0 0.0
    %502 = vmatpush1.msra.mxu0 %v363
    %503 = vmatprep.subr.mxu0 0.0
    %504 = vmatpush1.msra.mxu0 %v366
    %505 = vmatprep.subr.mxu0 0.0
    %506 = vmatpush1.msra.mxu0 %v369
    %507 = vmatprep.subr.mxu0 0.0
    %508 = vmatpush1.msra.mxu0 %v372
    %509 = vmatprep.subr.mxu0 0.0
    %510 = vmatpush1.msra.mxu0 %v375
    %511 = vmatprep.mubr.f32.mxu0 %v279
    %512 = vmatmul.mubr.f32.gmra.mrb[0].mxu0 %v278
    %v513 = vpop.f32.mrb[0].mxu0
    %v514 = vadd.f32 0.0, %v513
    %v515 = vpop.f32.mrb[0].mxu0
    %516 = vdwg.mxu0
    %v517 = vmax.f32 %v443, 0.0
    %v518 = vmax.f32 %v445, 0.0
    %v519 = vmax.f32 %v514, 0.0
    %v520 = vadd.s32 %v167, 256
    %vm521 = vcmp.eq.s32.totalorder %v167, 288
    %vm522 = vcmp.eq.s32.totalorder %v275, 288
    %vm523 = vcmp.eq.s32.totalorder %v520, 288
    %v524 = vsel %vm521, 1.0, %v517
    %v525 = vsel %vm522, 1.0, %v518
    %v526 = vsel %vm523, 1.0, %v519
    %v527 = vld [vmem:[#allocation6] sm:$0xff]
    %v528 = vld [vmem:[#allocation6 + $0x8] sm:$0xff]
    %v529 = vld [vmem:[#allocation6 + $0x10] sm:$0xff]
    %v530 = vld [vmem:[#allocation6 + $0x18] sm:$0xff]
    %v531 = vld [vmem:[#allocation6 + $0x20] sm:$0xff]
    %v532 = vld [vmem:[#allocation6 + $0x28] sm:$0xff]
    %v533 = vld [vmem:[#allocation6 + $0x30] sm:$0xff]
    %v534 = vld [vmem:[#allocation6 + $0x38] sm:$0xff]
    %v535 = vld [vmem:[#allocation6 + $0x40] sm:$0xff]
    %v536 = vld [vmem:[#allocation6 + $0x48] sm:$0xff]
    %v537 = vld [vmem:[#allocation6 + $0x50] sm:$0xff]
    %v538 = vld [vmem:[#allocation6 + $0x58] sm:$0xff]
    %v539 = vld [vmem:[#allocation6 + $0x60] sm:$0xff]
    %v540 = vld [vmem:[#allocation6 + $0x68] sm:$0xff]
    %v541 = vld [vmem:[#allocation6 + $0x70] sm:$0xff]
    %v542 = vld [vmem:[#allocation6 + $0x78] sm:$0xff]
    %v543 = vld [vmem:[#allocation6 + $0x80] sm:$0xff]
    %v544 = vld [vmem:[#allocation6 + $0x88] sm:$0xff]
    %v545 = vld [vmem:[#allocation6 + $0x90] sm:$0xff]
    %v546 = vld [vmem:[#allocation6 + $0x98] sm:$0xff]
    %v547 = vld [vmem:[#allocation6 + $0xa0] sm:$0xff]
    %v548 = vld [vmem:[#allocation6 + $0xa8] sm:$0xff]
    %v549 = vld [vmem:[#allocation6 + $0xb0] sm:$0xff]
    %v550 = vld [vmem:[#allocation6 + $0xb8] sm:$0xff]
    %v551 = vld [vmem:[#allocation6 + $0xc0] sm:$0xff]
    %v552 = vld [vmem:[#allocation6 + $0xc8] sm:$0xff]
    %v553 = vld [vmem:[#allocation6 + $0xd0] sm:$0xff]
    %v554 = vld [vmem:[#allocation6 + $0xd8] sm:$0xff]
    %v555 = vld [vmem:[#allocation6 + $0xe0] sm:$0xff]
    %v556 = vld [vmem:[#allocation6 + $0xe8] sm:$0xff]
    %v557 = vld [vmem:[#allocation6 + $0xf0] sm:$0xff]
    %v558 = vld [vmem:[#allocation6 + $0xf8] sm:$0xff]
    %v559 = vld [vmem:[#allocation6 + $0x100] sm:$0xff]
    %v560 = vld [vmem:[#allocation6 + $0x108] sm:$0xff]
    %v561 = vld [vmem:[#allocation6 + $0x110] sm:$0xff]
    %v562 = vld [vmem:[#allocation6 + $0x118] sm:$0xff]
    %v563 = vld [vmem:[#allocation6 + $0x120] sm:$0xff]
    %v564 = vld [vmem:[#allocation6 + $0x128] sm:$0xff]
    %v565 = vld [vmem:[#allocation6 + $0x130] sm:$0xff]
    %v566 = vld [vmem:[#allocation6 + $0x138] sm:$0xff]
    %v567 = vld [vmem:[#allocation6 + $0x140] sm:$0xff]
    %v568 = vld [vmem:[#allocation6 + $0x148] sm:$0xff]
    %v569 = vld [vmem:[#allocation6 + $0x150] sm:$0xff]
    %v570 = vld [vmem:[#allocation6 + $0x158] sm:$0xff]
    %v571 = vld [vmem:[#allocation6 + $0x160] sm:$0xff]
    %v572 = vld [vmem:[#allocation6 + $0x168] sm:$0xff]
    %v573 = vld [vmem:[#allocation6 + $0x170] sm:$0xff]
    %v574 = vld [vmem:[#allocation6 + $0x178] sm:$0xff]
    %575 = vmatprep.subr.mxu0 0.0
    %576 = vmatpush1.msra.mxu0 %v527
    %577 = vmatprep.subr.mxu0 0.0
    %578 = vmatpush1.msra.mxu0 %v528
    %579 = vmatprep.subr.mxu0 0.0
    %580 = vmatpush1.msra.mxu0 %v529
    %581 = vmatprep.subr.mxu0 0.0
    %582 = vmatpush1.msra.mxu0 %v530
    %583 = vmatprep.subr.mxu0 0.0
    %584 = vmatpush1.msra.mxu0 %v531
    %585 = vmatprep.subr.mxu0 0.0
    %586 = vmatpush1.msra.mxu0 %v532
    %587 = vmatprep.subr.mxu0 0.0
    %588 = vmatpush1.msra.mxu0 %v533
    %589 = vmatprep.subr.mxu0 0.0
    %590 = vmatpush1.msra.mxu0 %v534
    %591 = vmatprep.subr.mxu0 0.0
    %592 = vmatpush1.msra.mxu0 %v535
    %593 = vmatprep.subr.mxu0 0.0
    %594 = vmatpush1.msra.mxu0 %v536
    %595 = vmatprep.subr.mxu0 0.0
    %596 = vmatpush1.msra.mxu0 %v537
    %597 = vmatprep.subr.mxu0 0.0
    %598 = vmatpush1.msra.mxu0 %v538
    %599 = vmatprep.subr.mxu0 0.0
    %600 = vmatpush1.msra.mxu0 %v539
    %601 = vmatprep.subr.mxu0 0.0
    %602 = vmatpush1.msra.mxu0 %v540
    %603 = vmatprep.subr.mxu0 0.0
    %604 = vmatpush1.msra.mxu0 %v541
    %605 = vmatprep.subr.mxu0 0.0
    %606 = vmatpush1.msra.mxu0 %v542
    %607 = vmatprep.subr.mxu0 0.0
    %608 = vmatpush1.msra.mxu0 %v543
    %609 = vmatprep.subr.mxu0 0.0
    %610 = vmatpush1.msra.mxu0 %v544
    %611 = vmatprep.subr.mxu0 0.0
    %612 = vmatpush1.msra.mxu0 %v545
    %613 = vmatprep.subr.mxu0 0.0
    %614 = vmatpush1.msra.mxu0 %v546
    %615 = vmatprep.subr.mxu0 0.0
    %616 = vmatpush1.msra.mxu0 %v547
    %617 = vmatprep.subr.mxu0 0.0
    %618 = vmatpush1.msra.mxu0 %v548
    %619 = vmatprep.subr.mxu0 0.0
    %620 = vmatpush1.msra.mxu0 %v549
    %621 = vmatprep.subr.mxu0 0.0
    %622 = vmatpush1.msra.mxu0 %v550
    %623 = vmatprep.subr.mxu0 0.0
    %624 = vmatpush1.msra.mxu0 %v551
    %625 = vmatprep.subr.mxu0 0.0
    %626 = vmatpush1.msra.mxu0 %v552
    %627 = vmatprep.subr.mxu0 0.0
    %628 = vmatpush1.msra.mxu0 %v553
    %629 = vmatprep.subr.mxu0 0.0
    %630 = vmatpush1.msra.mxu0 %v554
    %631 = vmatprep.subr.mxu0 0.0
    %632 = vmatpush1.msra.mxu0 %v555
    %633 = vmatprep.subr.mxu0 0.0
    %634 = vmatpush1.msra.mxu0 %v556
    %635 = vmatprep.subr.mxu0 0.0
    %636 = vmatpush1.msra.mxu0 %v557
    %637 = vmatprep.subr.mxu0 0.0
    %638 = vmatpush1.msra.mxu0 %v558
    %639 = vmatprep.mubr.f32.mxu0 %v525
    %640 = vmatmul.mubr.f32.gmra.mrb[0].mxu0 %v524
    %v641 = vpop.f32.mrb[0].mxu0
    %v642 = vadd.f32 0.0, %v641
    %v643 = vpop.f32.mrb[0].mxu0
    %644 = vdwg.mxu0
    %645 = vmatprep.subr.mxu0 0.0
    %646 = vmatpush1.msra.mxu0 %v559
    %647 = vmatprep.subr.mxu0 0.0
    %648 = vmatpush1.msra.mxu0 %v560
    %649 = vmatprep.subr.mxu0 0.0
    %650 = vmatpush1.msra.mxu0 %v561
    %651 = vmatprep.subr.mxu0 0.0
    %652 = vmatpush1.msra.mxu0 %v562
    %653 = vmatprep.subr.mxu0 0.0
    %654 = vmatpush1.msra.mxu0 %v563
    %655 = vmatprep.subr.mxu0 0.0
    %656 = vmatpush1.msra.mxu0 %v564
    %657 = vmatprep.subr.mxu0 0.0
    %658 = vmatpush1.msra.mxu0 %v565
    %659 = vmatprep.subr.mxu0 0.0
    %660 = vmatpush1.msra.mxu0 %v566
    %661 = vmatprep.subr.mxu0 0.0
    %662 = vmatpush1.msra.mxu0 %v567
    %663 = vmatprep.subr.mxu0 0.0
    %664 = vmatpush1.msra.mxu0 %v568
    %665 = vmatprep.subr.mxu0 0.0
    %666 = vmatpush1.msra.mxu0 %v569
    %667 = vmatprep.subr.mxu0 0.0
    %668 = vmatpush1.msra.mxu0 %v570
    %669 = vmatprep.subr.mxu0 0.0
    %670 = vmatpush1.msra.mxu0 %v571
    %671 = vmatprep.subr.mxu0 0.0
    %672 = vmatpush1.msra.mxu0 %v572
    %673 = vmatprep.subr.mxu0 0.0
    %674 = vmatpush1.msra.mxu0 %v573
    %675 = vmatprep.subr.mxu0 0.0
    %676 = vmatpush1.msra.mxu0 %v574
    %677 = vmatprep.subr.mxu0 0.0
    %678 = vmatpush1.msra.mxu0 0.0
    %679 = vmatprep.subr.mxu0 0.0
    %680 = vmatpush1.msra.mxu0 0.0
    %681 = vmatprep.subr.mxu0 0.0
    %682 = vmatpush1.msra.mxu0 0.0
    %683 = vmatprep.subr.mxu0 0.0
    %684 = vmatpush1.msra.mxu0 0.0
    %685 = vmatprep.subr.mxu0 0.0
    %686 = vmatpush1.msra.mxu0 0.0
    %687 = vmatprep.subr.mxu0 0.0
    %688 = vmatpush1.msra.mxu0 0.0
    %689 = vmatprep.subr.mxu0 0.0
    %690 = vmatpush1.msra.mxu0 0.0
    %691 = vmatprep.subr.mxu0 0.0
    %692 = vmatpush1.msra.mxu0 0.0
    %693 = vmatprep.subr.mxu0 0.0
    %694 = vmatpush1.msra.mxu0 0.0
    %695 = vmatprep.subr.mxu0 0.0
    %696 = vmatpush1.msra.mxu0 0.0
    %697 = vmatprep.subr.mxu0 0.0
    %698 = vmatpush1.msra.mxu0 0.0
    %699 = vmatprep.subr.mxu0 0.0
    %700 = vmatpush1.msra.mxu0 0.0
    %701 = vmatprep.subr.mxu0 0.0
    %702 = vmatpush1.msra.mxu0 0.0
    %703 = vmatprep.subr.mxu0 0.0
    %704 = vmatpush1.msra.mxu0 0.0
    %705 = vmatprep.subr.mxu0 0.0
    %706 = vmatpush1.msra.mxu0 0.0
    %707 = vmatprep.subr.mxu0 0.0
    %708 = vmatpush1.msra.mxu0 0.0
    %709 = vmatprep.mubr.f32.mxu0 0.0
    %710 = vmatmul.mubr.f32.gmra.mrb[0].mxu0 %v526
    %v711 = vpop.f32.mrb[0].mxu0
    %v712 = vadd.f32 %v642, %v711
    %v713 = vpop.f32.mrb[0].mxu0
    %714 = vdwg.mxu0
    %v715 = vmax.f32 %v712, 0.0
    %v716 = vsel %vm168, 1.0, %v715
    %v717 = vld [vmem:[#allocation7] sm:$0xff]
    %v718 = vld [vmem:[#allocation7 + $0x8] sm:$0xff]
    %v719 = vld [vmem:[#allocation7 + $0x10] sm:$0xff]
    %v720 = vld [vmem:[#allocation7 + $0x18] sm:$0xff]
    %v721 = vld [vmem:[#allocation7 + $0x20] sm:$0xff]
    %v722 = vld [vmem:[#allocation7 + $0x28] sm:$0xff]
    %v723 = vld [vmem:[#allocation7 + $0x30] sm:$0xff]
    %v724 = vld [vmem:[#allocation7 + $0x38] sm:$0xff]
    %v725 = vld [vmem:[#allocation7 + $0x40] sm:$0xff]
    %v726 = vld [vmem:[#allocation7 + $0x48] sm:$0xff]
    %v727 = vld [vmem:[#allocation7 + $0x50] sm:$0xff]
    %v728 = vld [vmem:[#allocation7 + $0x58] sm:$0xff]
    %v729 = vld [vmem:[#allocation7 + $0x60] sm:$0xff]
    %v730 = vld [vmem:[#allocation7 + $0x68] sm:$0xff]
    %v731 = vld [vmem:[#allocation7 + $0x70] sm:$0xff]
    %v732 = vld [vmem:[#allocation7 + $0x78] sm:$0xff]
    %733 = vmatprep.subr.mxu0 0.0
    %734 = vmatpush1.msra.mxu0 %v717
    %735 = vmatprep.subr.mxu0 0.0
    %736 = vmatpush1.msra.mxu0 %v718
    %737 = vmatprep.subr.mxu0 0.0
    %738 = vmatpush1.msra.mxu0 %v719
    %739 = vmatprep.subr.mxu0 0.0
    %740 = vmatpush1.msra.mxu0 %v720
    %741 = vmatprep.subr.mxu0 0.0
    %742 = vmatpush1.msra.mxu0 %v721
    %743 = vmatprep.subr.mxu0 0.0
    %744 = vmatpush1.msra.mxu0 %v722
    %745 = vmatprep.subr.mxu0 0.0
    %746 = vmatpush1.msra.mxu0 %v723
    %747 = vmatprep.subr.mxu0 0.0
    %748 = vmatpush1.msra.mxu0 %v724
    %749 = vmatprep.subr.mxu0 0.0
    %750 = vmatpush1.msra.mxu0 %v725
    %751 = vmatprep.subr.mxu0 0.0
    %752 = vmatpush1.msra.mxu0 %v726
    %753 = vmatprep.subr.mxu0 0.0
    %754 = vmatpush1.msra.mxu0 %v727
    %755 = vmatprep.subr.mxu0 0.0
    %756 = vmatpush1.msra.mxu0 %v728
    %757 = vmatprep.subr.mxu0 0.0
    %758 = vmatpush1.msra.mxu0 %v729
    %759 = vmatprep.subr.mxu0 0.0
    %760 = vmatpush1.msra.mxu0 %v730
    %761 = vmatprep.subr.mxu0 0.0
    %762 = vmatpush1.msra.mxu0 %v731
    %763 = vmatprep.subr.mxu0 0.0
    %764 = vmatpush1.msra.mxu0 %v732
    %765 = vmatprep.subr.mxu0 0.0
    %766 = vmatpush1.msra.mxu0 0.0
    %767 = vmatprep.subr.mxu0 0.0
    %768 = vmatpush1.msra.mxu0 0.0
    %769 = vmatprep.subr.mxu0 0.0
    %770 = vmatpush1.msra.mxu0 0.0
    %771 = vmatprep.subr.mxu0 0.0
    %772 = vmatpush1.msra.mxu0 0.0
    %773 = vmatprep.subr.mxu0 0.0
    %774 = vmatpush1.msra.mxu0 0.0
    %775 = vmatprep.subr.mxu0 0.0
    %776 = vmatpush1.msra.mxu0 0.0
    %777 = vmatprep.subr.mxu0 0.0
    %778 = vmatpush1.msra.mxu0 0.0
    %779 = vmatprep.subr.mxu0 0.0
    %780 = vmatpush1.msra.mxu0 0.0
    %781 = vmatprep.subr.mxu0 0.0
    %782 = vmatpush1.msra.mxu0 0.0
    %783 = vmatprep.subr.mxu0 0.0
    %784 = vmatpush1.msra.mxu0 0.0
    %785 = vmatprep.subr.mxu0 0.0
    %786 = vmatpush1.msra.mxu0 0.0
    %787 = vmatprep.subr.mxu0 0.0
    %788 = vmatpush1.msra.mxu0 0.0
    %789 = vmatprep.subr.mxu0 0.0
    %790 = vmatpush1.msra.mxu0 0.0
    %791 = vmatprep.subr.mxu0 0.0
    %792 = vmatpush1.msra.mxu0 0.0
    %793 = vmatprep.subr.mxu0 0.0
    %794 = vmatpush1.msra.mxu0 0.0
    %795 = vmatprep.subr.mxu0 0.0
    %796 = vmatpush1.msra.mxu0 0.0
    %797 = vmatprep.mubr.f32.mxu0 0.0
    %798 = vmatmul.mubr.f32.gmra.mrb[0].mxu0 %v716
    %v799 = vpop.f32.mrb[0].mxu0
    %v800 = vadd.f32 0.0, %v799
    %v801 = vpop.f32.mrb[0].mxu0
    %802 = vdwg.mxu0
    %vm803 = vcmp.ge.s32.totalorder %v167, 24
    %vm804 = vcmp.lt.s32.totalorder %v167, 48
    %vm805 = vmand %vm803, %vm804
    %v806 = vmax.f32 %v800, -20.0
    %v807 = vmin.f32 %v806, 1.0
    %v808 = vsel %vm805, %v807, %v800
    %v809 = vmul.f32 %v808, 2.0
    %v810 = vmul.f32 %v809, 1.442695
    %v811 = vpow.pop %v810
    %813 = vrot.lane.b32.xlu0 %v809, 104
    %v814 = vpop.permute.xlu0 %813
    %vm816 = vcmask 64512
    %v817 = vsel %vm816, %v814, 0.0
    %818 = vadd.xlane.f32.xlu0 %v817
    %v819 = vpop.xlane.xlu0 %818
    %820 = vrot.lane.b32.xlu0 %v809, 96
    %v821 = vpop.permute.xlu0 %820
    %v823 = vsel %vm816, %v821, 0.0
    %824 = vadd.xlane.f32.xlu0 %v823
    %v825 = vpop.xlane.xlu0 %824
    %826 = vrot.lane.b32.xlu0 %v809, 88
    %v827 = vpop.permute.xlu0 %826
    %v829 = vsel %vm816, %v827, 0.0
    %830 = vadd.xlane.f32.xlu0 %v829
    %v831 = vpop.xlane.xlu0 %830
    %v832 = vadd.f32 %v819, 5.5451775
    %v833 = vmul.f32 %v832, -0.5
    %v834 = vadd.f32 %v825, 5.5451775
    %v835 = vmul.f32 %v834, -0.5
    %v836 = vadd.f32 %v831, 5.5451775
    %v837 = vmul.f32 %v836, -0.5
    %839 = vrot.lane.b32.xlu0 %v808, 120
    %v840 = vpop.permute.xlu0 %839
    %v842 = vsub.f32 %v808, %v840
    %844 = vrot.lane.b32.xlu0 %v811, 120
    %v845 = vpop.permute.xlu0 %844
    %v847 = vadd.f32 %v811, %v845
    %v848 = vmul.f32 %v842, %v842
    %850 = vrot.lane.b32.xlu0 %v847, 104
    %v851 = vpop.permute.xlu0 %850
    %v853 = vrcp.pop %v851
    %v854 = vmul.f32 %v848, %v853
    %v855 = vsel %vm816, %v854, 0.0
    %856 = vadd.xlane.f32.xlu0 %v855
    %v857 = vpop.xlane.xlu0 %856
    %v858 = vlog2.pop %v847
    %v859 = vmul.f32 %v858, 0.6931472
    %861 = vrot.lane.b32.xlu0 %v859, 104
    %v862 = vpop.permute.xlu0 %861
    %v864 = vsel %vm816, %v862, 0.0
    %865 = vadd.xlane.f32.xlu0 %v864
    %v866 = vpop.xlane.xlu0 %865
    %v867 = vadd.f32 %v857, %v866
    %v868 = vmul.f32 %v867, -0.5
    %869 = vrot.lane.b32.xlu0 %v808, 112
    %v870 = vpop.permute.xlu0 %869
    %v872 = vsub.f32 %v808, %v870
    %873 = vrot.lane.b32.xlu0 %v811, 112
    %v874 = vpop.permute.xlu0 %873
    %v876 = vadd.f32 %v811, %v874
    %v877 = vmul.f32 %v872, %v872
    %879 = vrot.lane.b32.xlu0 %v876, 104
    %v880 = vpop.permute.xlu0 %879
    %v882 = vrcp.pop %v880
    %v883 = vmul.f32 %v877, %v882
    %v884 = vsel %vm816, %v883, 0.0
    %885 = vadd.xlane.f32.xlu0 %v884
    %v886 = vpop.xlane.xlu0 %885
    %v887 = vlog2.pop %v876
    %v888 = vmul.f32 %v887, 0.6931472
    %890 = vrot.lane.b32.xlu0 %v888, 104
    %v891 = vpop.permute.xlu0 %890
    %v893 = vsel %vm816, %v891, 0.0
    %894 = vadd.xlane.f32.xlu0 %v893
    %v895 = vpop.xlane.xlu0 %894
    %v896 = vadd.f32 %v886, %v895
    %v897 = vmul.f32 %v896, -0.5
    %899 = vrot.lane.b32.xlu0 %v854, 120
    %v900 = vpop.permute.xlu0 %899
    %v902 = vsel %vm816, %v900, 0.0
    %903 = vadd.xlane.f32.xlu0 %v902
    %v904 = vpop.xlane.xlu0 %903
    %905 = vrot.lane.b32.xlu0 %v859, 96
    %v906 = vpop.permute.xlu0 %905
    %v908 = vsel %vm816, %v906, 0.0
    %909 = vadd.xlane.f32.xlu0 %v908
    %v910 = vpop.xlane.xlu0 %909
    %v911 = vadd.f32 %v904, %v910
    %v912 = vmul.f32 %v911, -0.5
    %v913 = vmax.f32 %v833, %v835
    %v914 = vmax.f32 %v913, %v837
    %v915 = vmax.f32 %v914, %v868
    %v916 = vmax.f32 %v915, %v897
    %v917 = vmax.f32 %v916, %v912
    %v918 = vsub.f32 %v833, %v917
    %v919 = vmul.f32 %v918, 1.442695
    %v920 = vpow.pop %v919
    %v921 = vadd.f32 %v920, 0.0
    %v922 = vsub.f32 %v835, %v917
    %v923 = vmul.f32 %v922, 1.442695
    %v924 = vpow.pop %v923
    %v925 = vadd.f32 %v921, %v924
    %v926 = vsub.f32 %v837, %v917
    %v927 = vmul.f32 %v926, 1.442695
    %v928 = vpow.pop %v927
    %v929 = vadd.f32 %v925, %v928
    %v930 = vsub.f32 %v868, %v917
    %v931 = vmul.f32 %v930, 1.442695
    %v932 = vpow.pop %v931
    %v933 = vmul.f32 %v932, 2.0
    %v934 = vadd.f32 %v929, %v933
    %v935 = vsub.f32 %v897, %v917
    %v936 = vmul.f32 %v935, 1.442695
    %v937 = vpow.pop %v936
    %v938 = vmul.f32 %v937, 2.0
    %v939 = vadd.f32 %v934, %v938
    %v940 = vsub.f32 %v912, %v917
    %v941 = vmul.f32 %v940, 1.442695
    %v942 = vpow.pop %v941
    %v943 = vmul.f32 %v942, 2.0
    %v944 = vadd.f32 %v939, %v943
    %v945 = vsub.f32 0.0, %v917
    %v946 = vrcp.pop 9.0
    %v947 = vmul.f32 %v944, %v946
    %v948 = vlog2.pop %v947
    %v949 = vmul.f32 %v948, 0.6931472
    %v950 = vsub.f32 %v945, %v949
    %v951 = vadd.f32 %v819, 0.0
    %v952 = vadd.f32 %v951, %v825
    %v953 = vadd.f32 %v952, %v831
    %v954 = vrcp.pop 3.0
    %v955 = vmul.f32 %v953, %v954
    %v956 = vmul.f32 %v955, 0.5
    %v957 = vadd.f32 %v956, 2.7725887
    %v958 = vsub.f32 %v950, %v957
    %v959 = vand.u32 2147483647, %v958
    %vm960 = vcmp.eq.s32.totalorder %v167, 48
    %v961 = vsel %vm960, %v959, %v808
    %962 = vst [vmem:[%s6] sm:$0xff] %v961
    // Predicated region
    $region42: #{ensemble_stochastic_linear_forward.1} parent=1 // pred_check
      _
    $region43: #{ensemble_stochastic_linear_forward.1} parent=1 // pred_check_branch
      %964 = sbr.rel (0) target = $region45
    $region44: #{ensemble_stochastic_linear_forward.1} parent=1 // pred_region
      _
    $region45: #{ensemble_stochastic_linear_forward.1} parent=1 // pred_fallthru
      _
    // Predicated region
    $region46: #{ensemble_stochastic_linear_forward.1} parent=1 // pred_check
      _
    $region47: #{ensemble_stochastic_linear_forward.1} parent=1 // pred_check_branch
      %966 = sbr.rel (0) target = $region49
    $region48: #{ensemble_stochastic_linear_forward.1} parent=1 // pred_region
      _
    $region49: #{ensemble_stochastic_linear_forward.1} parent=1 // pred_fallthru
      _
    %967 = vsyncpa [#allocation3], 1
    %968 = vsyncpa [#allocation5], 1
    %969 = vsyncpa [#allocation8], 1

</llo_original>
